<compile_context>
chip_gen: v7x
topology: tpu7x:2x2x1
jax: 0.10.0
libtpu: 0.0.40
codegen_flags: <defaults>
</compile_context>

<pallas_src>
import functools

import jax
import jax.numpy as jnp
from jax import lax
from jax.experimental import pallas as pl
from jax.experimental.pallas import tpu as pltpu

LANES = 128                 # vreg lane width
SUBLANES = 8                # f32 sublanes per vreg
MAX_ROWS_PER_TILE = 4096    # (4096, 128) f32 = 2 MiB per input block


def _cdiv(a, b):
    return -(-a // b)


def _num_tensorcores_per_chip():
    """Best-effort detection of TensorCores per chip (2 on v7x, else 1)."""
    try:
        info = pltpu.get_tpu_info()
        for name in ("num_cores", "num_tensorcores", "tensorcores_per_chip",
                     "cores_per_chip", "core_count"):
            v = getattr(info, name, None)
            if isinstance(v, int) and 1 <= v <= 8:
                return min(int(v), 2)
    except Exception:
        pass
    try:
        kind = jax.devices()[0].device_kind.lower()
        if "v7" in kind or "7x" in kind:
            return 2
    except Exception:
        pass
    return 1


def _charbonnier_partial_kernel(x_ref, y_ref, o_ref, *, eps2, rows_total,
                                rows_per_tile, acc_rows, steps_per_partial,
                                needs_mask):
    i = pl.program_id(1)    # sequential reduction step within this partial

    @pl.when(i == 0)
    def _init():
        o_ref[...] = jnp.zeros_like(o_ref)

    # Cast on the VMEM tile (inputs stay in native dtype in HBM).
    d = x_ref[...].astype(jnp.float32) - y_ref[...].astype(jnp.float32)
    val = jnp.sqrt(d * d + jnp.float32(eps2))

    folds = rows_per_tile // acc_rows

    def _fold(v):
        # (rows_per_tile, 128) -> (acc_rows, 128): acc_rows//8 independent
        # vreg accumulation chains instead of one serial chain into 1 vreg.
        if folds == 1:
            return v
        return v.reshape(folds, acc_rows, LANES).sum(axis=0)

    if not needs_mask:
        # Grid exactly covers the data: no mask code emitted at all.
        o_ref[...] += _fold(val)
    else:
        c = pl.program_id(0)
        # Unclamped logical tile index; the input index_map clamps the DMA,
        # the mask below zeroes duplicated / out-of-range rows.
        tile_base = (c * steps_per_partial + i) * rows_per_tile
        in_range = tile_base + rows_per_tile <= rows_total

        @pl.when(in_range)
        def _fast():
            o_ref[...] += _fold(val)

        @pl.when(jnp.logical_not(in_range))
        def _masked():
            rows_valid = rows_total - tile_base      # scalar, may be <= 0
            row = lax.broadcasted_iota(jnp.int32, val.shape, 0)
            o_ref[...] += _fold(
                jnp.where(row < rows_valid, val, jnp.float32(0.0)))


def charbonnier_loss(x, y, *, eps=1e-3, loss_weight=1.0):
    """Pallas implementation of CharbonnierLoss.forward(x, y) ('mean' reduction)."""
    assert x.shape == y.shape, "x and y must have the same shape"
    n_valid = x.size
    eps2 = float(eps) * float(eps)

    xf = x.reshape(-1)
    yf = y.reshape(-1)

    # Stream the 1024-aligned prefix through the kernel; the <1024-element
    # tail is added with a tiny pure-JAX expression (no full-array jnp.pad).
    # TODO(synk): for non-aligned sizes the prefix slice may still cost one
    # HBM copy; a manual-DMA kernel over the raw 1-D HBM ref would avoid it.
    align = SUBLANES * LANES
    n_prefix = (n_valid // align) * align

    total = jnp.float32(0.0)

    if n_prefix > 0:
        rows = n_prefix // LANES                        # multiple of 8
        x2d = xf[:n_prefix].reshape(rows, LANES)
        y2d = yf[:n_prefix].reshape(rows, LANES)

        rows_per_tile = min(MAX_ROWS_PER_TILE, rows)    # multiple of 8
        num_row_tiles = _cdiv(rows, rows_per_tile)

        num_cores = _num_tensorcores_per_chip()
        num_partials = num_cores if num_row_tiles >= num_cores else 1
        steps_per_partial = _cdiv(num_row_tiles, num_partials)

        covered_rows = num_partials * steps_per_partial * rows_per_tile
        needs_mask = covered_rows > rows                # static Python bool

        # Widest accumulator block that divides the tile (usually 64 rows).
        acc_rows = next(r for r in (64, 32, 16, 8) if rows_per_tile % r == 0)

        last_tile = num_row_tiles - 1

        def in_map(c, i):
            # Clamp so the DMA never reads a block past the array; the
            # in-kernel mask (from the *unclamped* index) zeroes duplicates.
            t = c * steps_per_partial + i
            return (jnp.minimum(t, last_tile), 0)

        kernel = functools.partial(
            _charbonnier_partial_kernel,
            eps2=eps2,
            rows_total=rows,
            rows_per_tile=rows_per_tile,
            acc_rows=acc_rows,
            steps_per_partial=steps_per_partial,
            needs_mask=needs_mask,
        )

        def _run(first_axis_sem):
            return pl.pallas_call(
                kernel,
                out_shape=jax.ShapeDtypeStruct(
                    (num_partials * acc_rows, LANES), jnp.float32),
                grid_spec=pltpu.PrefetchScalarGridSpec(
                    num_scalar_prefetch=0,
                    grid=(num_partials, steps_per_partial),
                    in_specs=[
                        pl.BlockSpec((rows_per_tile, LANES), in_map),
                        pl.BlockSpec((rows_per_tile, LANES), in_map),
                    ],
                    out_specs=pl.BlockSpec((acc_rows, LANES),
                                           lambda c, i: (c, 0)),
                ),
                compiler_params=pltpu.CompilerParams(
                    dimension_semantics=(first_axis_sem, pltpu.ARBITRARY),
                    vmem_limit_bytes=32 * 1024 * 1024,
                ),
            )(x2d, y2d)

        if num_partials > 1:
            # Real 2-TC split on v7x; fall back if CORE_PARALLEL is rejected.
            try:
                partials = _run(pltpu.CORE_PARALLEL)
            except Exception:
                partials = _run(pltpu.PARALLEL)
        else:
            partials = _run(pltpu.ARBITRARY)

        # Single cross-lane reduction, once, in the wrapper.
        total = total + jnp.sum(partials, dtype=jnp.float32)

    if n_prefix < n_valid:
        dx = (xf[n_prefix:].astype(jnp.float32)
              - yf[n_prefix:].astype(jnp.float32))
        total = total + jnp.sum(jnp.sqrt(dx * dx + jnp.float32(eps2)))

    loss = total / jnp.float32(n_valid)
    return jnp.float32(loss_weight) * loss


def _reference(x, y, eps):
    d = x.astype(jnp.float32) - y.astype(jnp.float32)
    return jnp.mean(jnp.sqrt(d * d + jnp.float32(eps) * jnp.float32(eps)))


if __name__ == "__main__":
    key = jax.random.PRNGKey(0)
    kx, ky = jax.random.split(key)

    # Primary example: small NCHW inputs matching the PyTorch module's usage
    # (2048 elements, lane/sublane aligned, single tile, no mask path).
    x = jax.random.normal(kx, (2, 4, 16, 16), dtype=jnp.float32)
    y = jax.random.normal(ky, (2, 4, 16, 16), dtype=jnp.float32)
    out = jax.block_until_ready(charbonnier_loss(x, y, eps=1e-3))
    ref = _reference(x, y, 1e-3)
    assert jnp.allclose(out, ref, rtol=1e-5, atol=1e-6), (out, ref)

    # Multi-tile case with a partial last tile: exercises the unmasked fast
    # path on interior tiles and the masked path on the tail tile.  Slightly
    # looser rtol: different (but both valid) f32 reduction orders.
    x2 = jax.random.normal(kx, (1, 3, 512, 512), dtype=jnp.float32)
    y2 = jax.random.normal(ky, (1, 3, 512, 512), dtype=jnp.float32)
    out2 = jax.block_until_ready(charbonnier_loss(x2, y2, eps=1e-3))
    ref2 = _reference(x2, y2, 1e-3)
    assert jnp.allclose(out2, ref2, rtol=1e-4, atol=1e-6), (out2, ref2)

    # Non-aligned total size: kernel over the 1024-aligned prefix plus the
    # <1024-element pure-JAX tail.
    x3 = jax.random.normal(kx, (2, 3, 13, 17), dtype=jnp.float32)
    y3 = jax.random.normal(ky, (2, 3, 13, 17), dtype=jnp.float32)
    out3 = jax.block_until_ready(charbonnier_loss(x3, y3, eps=1e-3))
    ref3 = _reference(x3, y3, 1e-3)
    assert jnp.allclose(out3, ref3, rtol=1e-5, atol=1e-6), (out3, ref3)

    # Tiny input (< 1024 elements): all-tail pure-JAX path.
    x4 = jax.random.normal(kx, (2, 3, 5, 7), dtype=jnp.float32)
    y4 = jax.random.normal(ky, (2, 3, 5, 7), dtype=jnp.float32)
    out4 = jax.block_until_ready(charbonnier_loss(x4, y4, eps=1e-3))
    ref4 = _reference(x4, y4, 1e-3)
    assert jnp.allclose(out4, ref4, rtol=1e-5, atol=1e-6), (out4, ref4)

    print("KERNEL_OK")
</pallas_src>

<mosaic_0001>
module attributes {stable_mosaic.version = 11 : i64} {
  func.func @_charbonnier_partial_kernel(%arg0: i32, %arg1: i32, %arg2: memref<16x128xf32, #tpu.memory_space<vmem>>, %arg3: memref<16x128xf32, #tpu.memory_space<vmem>>, %arg4: memref<16x128xf32, #tpu.memory_space<vmem>>) attributes {dimension_semantics = [#tpu.dimension_semantics<arbitrary>, #tpu.dimension_semantics<arbitrary>], iteration_bounds = array<i64: 1, 1>, scalar_prefetch = 0 : i64, scratch_operands = 0 : i64, tpu.core_type = #tpu.core_type<tc>, window_params = [{transform_indices = @transform_0, window_bounds = array<i64: 16, 128>}, {transform_indices = @transform_1, window_bounds = array<i64: 16, 128>}, {transform_indices = @transform_2, window_bounds = array<i64: 16, 128>}]} {
    %c0_i32 = arith.constant 0 : i32
    %0 = arith.cmpi eq, %arg1, %c0_i32 : i32
    %1 = arith.extui %0 : i1 to i32
    %c0_i32_0 = arith.constant 0 : i32
    %2 = arith.cmpi ne, %1, %c0_i32_0 : i32
    scf.if %2 {
      %cst_8 = arith.constant 0.000000e+00 : f32
      %13 = vector.broadcast %cst_8 : f32 to vector<16x128xf32>
      %c0_9 = arith.constant 0 : index
      %c0_10 = arith.constant 0 : index
      %14 = vector.load %arg4[%c0_9, %c0_10] : memref<16x128xf32, #tpu.memory_space<vmem>>, vector<16x128xf32>
      tpu.vector_store %arg4[%c0_9, %c0_10], %13 {strides = array<i32>} : memref<16x128xf32, #tpu.memory_space<vmem>>, vector<16x128xf32>,
    } else {
    }
    %c0 = arith.constant 0 : index
    %c0_1 = arith.constant 0 : index
    %3 = vector.load %arg2[%c0, %c0_1] : memref<16x128xf32, #tpu.memory_space<vmem>>, vector<16x128xf32>
    %c0_2 = arith.constant 0 : index
    %c0_3 = arith.constant 0 : index
    %4 = vector.load %arg3[%c0_2, %c0_3] : memref<16x128xf32, #tpu.memory_space<vmem>>, vector<16x128xf32>
    %5 = arith.subf %3, %4 : vector<16x128xf32>
    %6 = arith.mulf %5, %5 : vector<16x128xf32>
    %cst = arith.constant 9.99999997E-7 : f32
    %7 = vector.broadcast %cst : f32 to vector<16x128xf32>
    %8 = arith.addf %6, %7 : vector<16x128xf32>
    %9 = math.sqrt %8 : vector<16x128xf32>
    %c0_4 = arith.constant 0 : index
    %c0_5 = arith.constant 0 : index
    %10 = vector.load %arg4[%c0_4, %c0_5] : memref<16x128xf32, #tpu.memory_space<vmem>>, vector<16x128xf32>
    %11 = arith.addf %10, %9 : vector<16x128xf32>
    %c0_6 = arith.constant 0 : index
    %c0_7 = arith.constant 0 : index
    %12 = vector.load %arg4[%c0_6, %c0_7] : memref<16x128xf32, #tpu.memory_space<vmem>>, vector<16x128xf32>
    tpu.vector_store %arg4[%c0_6, %c0_7], %11 {strides = array<i32>} : memref<16x128xf32, #tpu.memory_space<vmem>>, vector<16x128xf32>,
    return
  }
  func.func @transform_0(%arg0: i32, %arg1: i32) -> (i32, i32) {
    %c1_i32 = arith.constant 1 : i32
    %0 = arith.muli %arg0, %c1_i32 : i32
    %1 = arith.addi %0, %arg1 : i32
    %c0_i32 = arith.constant 0 : i32
    %2 = arith.minsi %1, %c0_i32 : i32
    %c0_i32_0 = arith.constant 0 : i32
    %c0_i32_1 = arith.constant 0 : i32
    return %2, %c0_i32_0 : i32, i32
  }
  func.func @transform_1(%arg0: i32, %arg1: i32) -> (i32, i32) {
    %c1_i32 = arith.constant 1 : i32
    %0 = arith.muli %arg0, %c1_i32 : i32
    %1 = arith.addi %0, %arg1 : i32
    %c0_i32 = arith.constant 0 : i32
    %2 = arith.minsi %1, %c0_i32 : i32
    %c0_i32_0 = arith.constant 0 : i32
    %c0_i32_1 = arith.constant 0 : i32
    return %2, %c0_i32_0 : i32, i32
  }
  func.func @transform_2(%arg0: i32, %arg1: i32) -> (i32, i32) {
    %c0_i32 = arith.constant 0 : i32
    %c0_i32_0 = arith.constant 0 : i32
    return %arg0, %c0_i32 : i32, i32
  }
}

</mosaic_0001>

<llo_original>
// kernel: tpu_custom_call.1
$region0: #{tpu_custom_call.1}
  #allocation0 [shape = 'u32[]', space=smem, size = 0x4, offset = 0x4, fixed_abs, tag = 'smem constant byte address 0x4 - core index']
  #allocation1 [shape = 'u32[144,128]{1,0:T(1,128)}', space=vmem, size = 0x12000, scoped, tag = 'internal scratch']
  %s0 = inlined_call_operand.hbm [shape: f32[16,128], index: 0, kind: input, shape index: {}]
  %s1 = inlined_call_operand.hbm [shape: f32[16,128], index: 1, kind: input, shape index: {}]
  %s2 = inlined_call_operand.hbm [shape: f32[16,128], index: 2, kind: output, shape index: {}]
  %s3 = sld [smem:[#allocation0]]
  $region30: #{tpu_custom_call.1} parent=0
    _
  %s5 = ssub.s32 1, %s3
  %s6 = scalar_select 0, %s5, %s3
  $region1: #{tpu_custom_call.1} parent=0
    #allocation2 [shape = 'u8[8192]{0}', space=vmem, size = 0x2000, scoped, tag = 'input window, operand 0, single buffered']
    #allocation3 [shape = 's32[1]{0}', space=sflag, size = 0x4, scoped, tag = 'scoped memory for tpu_custom_call.1']
    #allocation4 [shape = 's32[1]{0}', space=sflag, size = 0x4, scoped, tag = 'scoped memory for tpu_custom_call.1']
    #allocation5 [shape = 'u8[8192]{0}', space=vmem, size = 0x2000, scoped, tag = 'input window, operand 1, single buffered']
    #allocation6 [shape = 's32[1]{0}', space=sflag, size = 0x4, scoped, tag = 'scoped memory for tpu_custom_call.1']
    #allocation7 [shape = 'u8[8192]{0}', space=vmem, size = 0x2000, scoped, tag = 'output window, operand 0, single buffered']
    %7 = vsyncpa [#allocation3], 0
    %8 = vsyncpa [#allocation6], 0
    %9 = vsyncpa [#allocation4], 0
    // Predicated region
    $region2: #{tpu_custom_call.1} parent=1 // pred_check
      _
    $region3: #{tpu_custom_call.1} parent=1 // pred_check_branch
      %11 = sbr.rel (0) target = $region5
    $region4: #{tpu_custom_call.1} parent=1 // pred_region
      %s12 = sadd.s32 0, 0
      %p13 = scmp.lt.s32.totalorder %s12, 0
      %s14 = scalar_select %p13, %s12, 0
      %s15 = smul.u32 2, %s14
      %s17 = ssub.s32 256, 256
      %18 = vsyncadd [#allocation3], %s17
      %s19 = smul.addr %s15, 128
      %s20 = scalar_lea.hbm %s0, %s19
      %s21 = sshll.u32 [#allocation2], 4
      %s22 = int_to_ptr.vmem [resolvable:$true] %s21
      %27 = dma.hbm_to_vmem [thread:$0]  %s20, 256, %s22, [#allocation3], 128, 128, 8
    $region5: #{tpu_custom_call.1} parent=1 // pred_fallthru
      _
    // Predicated region
    $region6: #{tpu_custom_call.1} parent=1 // pred_check
      _
    $region7: #{tpu_custom_call.1} parent=1 // pred_check_branch
      %29 = sbr.rel (0) target = $region9
    $region8: #{tpu_custom_call.1} parent=1 // pred_region
      %s30 = sadd.s32 0, 0
      %p31 = scmp.lt.s32.totalorder %s30, 0
      %s32 = scalar_select %p31, %s30, 0
      %s33 = smul.u32 2, %s32
      %s35 = ssub.s32 256, 256
      %36 = vsyncadd [#allocation6], %s35
      %s37 = smul.addr %s33, 128
      %s38 = scalar_lea.hbm %s1, %s37
      %s39 = sshll.u32 [#allocation5], 4
      %s40 = int_to_ptr.vmem [resolvable:$true] %s39
      %45 = dma.hbm_to_vmem [thread:$0]  %s38, 256, %s40, [#allocation6], 128, 128, 8
    $region9: #{tpu_custom_call.1} parent=1 // pred_fallthru
      _
    // Predicated region
    $region10: #{tpu_custom_call.1} parent=1 // pred_check
      _
    $region11: #{tpu_custom_call.1} parent=1 // pred_check_branch
      %47 = sbr.rel (0) target = $region13
    $region12: #{tpu_custom_call.1} parent=1 // pred_region
      %48 = dma.done [#allocation3], 256
    $region13: #{tpu_custom_call.1} parent=1 // pred_fallthru
      _
    // Predicated region
    $region14: #{tpu_custom_call.1} parent=1 // pred_check
      _
    $region15: #{tpu_custom_call.1} parent=1 // pred_check_branch
      %50 = sbr.rel (0) target = $region17
    $region16: #{tpu_custom_call.1} parent=1 // pred_region
      %51 = dma.done [#allocation6], 256
    $region17: #{tpu_custom_call.1} parent=1 // pred_fallthru
      _
    %s52 = sadd.s32 0, 0
    %p53 = scmp.lt.s32.totalorder %s52, 0
    %s54 = scalar_select %p53, %s52, 0
    %s55 = smul.u32 2, %s54
    %s56 = sadd.s32 0, 0
    %p57 = scmp.lt.s32.totalorder %s56, 0
    %s58 = scalar_select %p57, %s56, 0
    %s59 = smul.u32 2, %s58
    %p60 = scmp.eq.s32.totalorder 0, 0
    // Predicated region
    $region18: #{tpu_custom_call.1} parent=1 // pred_check
      %p61 = pneg %p60
    $region19: #{tpu_custom_call.1} parent=1 // pred_check_branch
      %63 = sbr.rel (%p61) target = $region21
    $region20: #{tpu_custom_call.1} parent=1 // pred_region
      %64 = vst [vmem:[#allocation7] sm:$0xff] 0.0
      %65 = vst [vmem:[#allocation7 + $0x8] sm:$0xff] 0.0
    $region21: #{tpu_custom_call.1} parent=1 // pred_fallthru
      _
    %v66 = vld [vmem:[#allocation2] sm:$0xff]
    %v67 = vld [vmem:[#allocation2 + $0x8] sm:$0xff]
    %v68 = vld [vmem:[#allocation5] sm:$0xff]
    %v69 = vld [vmem:[#allocation5 + $0x8] sm:$0xff]
    %v70 = vsub.f32 %v66, %v68
    %v71 = vsub.f32 %v67, %v69
    %v72 = vmul.f32 %v70, %v70
    %v73 = vmul.f32 %v71, %v71
    %v74 = vadd.f32 %v72, 1e-06
    %v75 = vadd.f32 %v73, 1e-06
    %v76 = vrsqrt.pop %v74
    %v77 = vmul.f32 %v74, %v76
    %vm78 = vcmp.eq.f32.partialorder %v74, inf
    %v79 = vsel %vm78, %v74, %v77
    %vm80 = vcmp.eq.f32.partialorder %v74, 0.0
    %v81 = vand.u32 %v74, 2147483648
    %v82 = vsel %vm80, %v81, %v79
    %v83 = vrsqrt.pop %v75
    %v84 = vmul.f32 %v75, %v83
    %vm85 = vcmp.eq.f32.partialorder %v75, inf
    %v86 = vsel %vm85, %v75, %v84
    %vm87 = vcmp.eq.f32.partialorder %v75, 0.0
    %v88 = vand.u32 %v75, 2147483648
    %v89 = vsel %vm87, %v88, %v86
    %v90 = vld [vmem:[#allocation7] sm:$0xff]
    %v91 = vld [vmem:[#allocation7 + $0x8] sm:$0xff]
    %v92 = vadd.f32 %v90, %v82
    %v93 = vadd.f32 %v91, %v89
    %94 = vst [vmem:[#allocation7] sm:$0xff] %v92
    %95 = vst [vmem:[#allocation7 + $0x8] sm:$0xff] %v93
    // Predicated region
    $region22: #{tpu_custom_call.1} parent=1 // pred_check
      _
    $region23: #{tpu_custom_call.1} parent=1 // pred_check_branch
      %97 = sbr.rel (0) target = $region25
    $region24: #{tpu_custom_call.1} parent=1 // pred_region
      %s99 = ssub.s32 256, 256
      %100 = vsyncadd [#allocation4], %s99
      %s101 = sshll.u32 [#allocation7], 4
      %s102 = int_to_ptr.vmem [resolvable:$true] %s101
      %107 = dma.vmem_to_hbm [thread:$0]  %s102, 256, %s2, [#allocation4], 128, 128, 8
    $region25: #{tpu_custom_call.1} parent=1 // pred_fallthru
      _
    // Predicated region
    $region26: #{tpu_custom_call.1} parent=1 // pred_check
      _
    $region27: #{tpu_custom_call.1} parent=1 // pred_check_branch
      %109 = sbr.rel (0) target = $region29
    $region28: #{tpu_custom_call.1} parent=1 // pred_region
      %110 = dma.done [#allocation4], 256
    $region29: #{tpu_custom_call.1} parent=1 // pred_fallthru
      _
    %111 = vsyncpa [#allocation3], 1
    %112 = vsyncpa [#allocation6], 1
    %113 = vsyncpa [#allocation4], 1

</llo_original>
